<compile_context>
chip_gen: v7x
topology: tpu7x:2x2x1
jax: 0.10.0
libtpu: 0.0.40
codegen_flags: <defaults>
</compile_context>

<pallas_src>
import functools

import jax
import jax.numpy as jnp
from jax.experimental import pallas as pl
from jax.experimental.pallas import tpu as pltpu


def _expand_and_replicate_kernel(x_ref, e_ref, o_ref, *, sh, ws, precision):
    """x_ref: (blk, W); e_ref: (W, Ws); o_ref: (blk, sh*Ws).

    Width expansion via one small 0/1 matmul (E has no sh factor), then the
    sh-fold row replication is done with `sh` static lane-offset stores.
    """
    y = jnp.dot(
        x_ref[...],
        e_ref[...],
        preferred_element_type=jnp.float32,
        precision=precision,
    ).astype(o_ref.dtype)
    for i in range(sh):
        o_ref[:, i * ws:(i + 1) * ws] = y


def _replicate_rows_kernel(x_ref, o_ref, *, sh, w):
    """sw == 1 fast path: pure replication (no MXU), exact for every dtype."""
    x = x_ref[...]
    for i in range(sh):
        o_ref[:, i * w:(i + 1) * w] = x


def _sublane_multiple(dtype):
    """Dtype-native sublane packing multiple (8 f32, 16 bf16/f16, 32 int8)."""
    itemsize = jnp.dtype(dtype).itemsize
    return max(8, 32 // max(1, itemsize))


def _pick_block_rows(total_rows, bytes_per_out_row, sublane):
    """~8 MiB of output per grid step, multiple of the dtype sublane count,
    an exact divisor of total_rows, and >= 2 grid steps when rows allow
    (so both v7x TensorCores get work)."""
    target_bytes = 8 * 1024 * 1024
    blk = max(sublane, min(total_rows, target_bytes // max(1, bytes_per_out_row)))
    if total_rows >= 2 * sublane:
        blk = min(blk, total_rows // 2)          # guarantee >= 2 grid steps
    blk = max(sublane, (blk // sublane) * sublane)
    while total_rows % blk != 0 and blk > sublane:
        blk -= sublane
    if total_rows % blk != 0:
        blk = total_rows                          # full dim is always legal
    return blk


@functools.partial(jax.jit, static_argnames=("scale_factor", "mode", "align_corners"))
def upsample(x, *, scale_factor, mode="nearest", align_corners=None):
    """Pallas equivalent of Upsample(scale_factor, mode, align_corners)(x)."""
    if mode != "nearest":
        # TODO(synk): only 'nearest' (the module default) is implemented.
        raise NotImplementedError("Only mode='nearest' is implemented.")
    del align_corners  # ignored by PyTorch for 'nearest'

    def _as_int(v):
        iv = int(v)
        if iv != v or iv < 1:
            raise NotImplementedError("Only positive integer scale factors are supported.")
        return iv

    if isinstance(scale_factor, tuple):
        sh, sw = (_as_int(v) for v in scale_factor)
    else:
        sh = sw = _as_int(scale_factor)

    N, C, H, W = x.shape
    Hs, Ws = H * sh, W * sw

    if sh == 1 and sw == 1:
        return x

    rows = N * C * H
    out_cols = sh * Ws                      # one output row-group per input row
    itemsize = jnp.dtype(x.dtype).itemsize
    sublane = _sublane_multiple(x.dtype)
    xr = x.reshape(rows, W)                 # free reshape
    blk = _pick_block_rows(rows, out_cols * itemsize, sublane)
    grid = (rows // blk,)
    in_bytes = rows * W * itemsize
    out_bytes = rows * out_cols * itemsize
    compiler_params = pltpu.CompilerParams(
        dimension_semantics=("parallel",),
        vmem_limit_bytes=48 * 1024 * 1024,
    )

    if sw == 1:
        # Pure row replication: no MXU, no E, exact for every dtype.
        out = pl.pallas_call(
            functools.partial(_replicate_rows_kernel, sh=sh, w=W),
            out_shape=jax.ShapeDtypeStruct((rows, out_cols), x.dtype),
            grid=grid,
            in_specs=[pl.BlockSpec((blk, W), lambda i: (i, 0))],
            out_specs=pl.BlockSpec((blk, out_cols), lambda i: (i, 0)),
            compiler_params=compiler_params,
            cost_estimate=pl.CostEstimate(
                flops=0, transcendentals=0, bytes_accessed=in_bytes + out_bytes),
        )(xr)
        return out.reshape(N, C, Hs, Ws)

    # sw > 1: the width expansion needs cross-lane data movement; do it with
    # one small 0/1 matmul (E: (W, Ws)), which keeps every store dense.
    if not jnp.issubdtype(x.dtype, jnp.floating):
        # TODO(synk): integer dtypes would lose bits (>2^24) through the f32
        # MXU path; fall back to an XLA replication for them.
        return jnp.repeat(jnp.repeat(x, sh, axis=2), sw, axis=3)

    e_bytes = W * Ws * itemsize
    if e_bytes > 8 * 1024 * 1024:
        # TODO(synk): extremely wide W needs W-axis tiling of E (and would
        # also want pl.Buffered(1) on E); fall back to XLA replication.
        return jnp.repeat(jnp.repeat(x, sh, axis=2), sw, axis=3)

    # Column-expansion operator only (sh factored out): E[w, wo] = (wo//sw == w).
    wo_src = jnp.arange(Ws, dtype=jnp.int32) // sw
    E = (wo_src[None, :] == jnp.arange(W, dtype=jnp.int32)[:, None]).astype(x.dtype)

    # bf16 x 0/1-bf16 is exact in a single default MXU pass; f32/f16 need the
    # split-pass path for a bit-exact copy.
    precision = (jax.lax.Precision.DEFAULT
                 if x.dtype == jnp.dtype(jnp.bfloat16)
                 else jax.lax.Precision.HIGHEST)

    out = pl.pallas_call(
        functools.partial(_expand_and_replicate_kernel,
                          sh=sh, ws=Ws, precision=precision),
        out_shape=jax.ShapeDtypeStruct((rows, out_cols), x.dtype),
        grid=grid,
        in_specs=[
            pl.BlockSpec((blk, W), lambda i: (i, 0)),    # row block of inputs
            pl.BlockSpec((W, Ws), lambda i: (0, 0)),     # E, resident in VMEM
        ],
        out_specs=pl.BlockSpec((blk, out_cols), lambda i: (i, 0)),
        compiler_params=compiler_params,
        cost_estimate=pl.CostEstimate(
            flops=2 * rows * Ws * W,                     # true matmul flops
            transcendentals=0,
            bytes_accessed=in_bytes + out_bytes + e_bytes),
    )(xr, E)

    # Free, contiguous reshape: (N*C*H, sh*Ws) row-major == (N, C, Hs, Ws).
    return out.reshape(N, C, Hs, Ws)


if __name__ == "__main__":
    key = jax.random.PRNGKey(0)

    # f32, scale 2 (matches the module's typical use).
    x = jax.random.normal(key, (2, 4, 16, 16), dtype=jnp.float32)
    y = jax.block_until_ready(upsample(x, scale_factor=2, mode="nearest"))
    ref = jnp.repeat(jnp.repeat(x, 2, axis=2), 2, axis=3)
    assert y.shape == (2, 4, 32, 32), y.shape
    assert y.dtype == x.dtype
    assert jnp.array_equal(y, ref), "mismatch vs nearest-upsample reference (f32, s=2)"

    # bf16, scale 2 (default-precision single-pass MXU path).
    xb = x.astype(jnp.bfloat16)
    yb = jax.block_until_ready(upsample(xb, scale_factor=2, mode="nearest"))
    refb = jnp.repeat(jnp.repeat(xb, 2, axis=2), 2, axis=3)
    assert yb.dtype == jnp.bfloat16
    assert jnp.array_equal(yb, refb), "mismatch vs nearest-upsample reference (bf16)"

    # Anisotropic scale, non-power-of-two H (exercises generic blocking).
    x2 = jax.random.normal(jax.random.PRNGKey(1), (2, 4, 5, 16), dtype=jnp.float32)
    y2 = jax.block_until_ready(upsample(x2, scale_factor=(3, 2), mode="nearest"))
    ref2 = jnp.repeat(jnp.repeat(x2, 3, axis=2), 2, axis=3)
    assert y2.shape == (2, 4, 15, 32), y2.shape
    assert jnp.array_equal(y2, ref2), "mismatch vs nearest-upsample reference (f32, s=(3,2))"

    # sw == 1 pure-replication (MXU-free) path.
    y3 = jax.block_until_ready(upsample(x, scale_factor=(2, 1), mode="nearest"))
    ref3 = jnp.repeat(x, 2, axis=2)
    assert y3.shape == (2, 4, 32, 16), y3.shape
    assert jnp.array_equal(y3, ref3), "mismatch vs nearest-upsample reference (sw=1)"

    print("KERNEL_OK")
</pallas_src>

<mosaic_0001>
module attributes {stable_mosaic.version = 11 : i64} {
  func.func @_expand_and_replicate_kernel(%arg0: i32, %arg1: memref<64x16xf32, #tpu.memory_space<vmem>>, %arg2: memref<16x32xf32, #tpu.memory_space<vmem>>, %arg3: memref<64x64xf32, #tpu.memory_space<vmem>>) attributes {dimension_semantics = [#tpu.dimension_semantics<parallel>], iteration_bounds = array<i64: 2>, scalar_prefetch = 0 : i64, scratch_operands = 0 : i64, tpu.core_type = #tpu.core_type<tc>, window_params = [{transform_indices = @transform_0, window_bounds = array<i64: 64, 16>}, {pipeline_mode = #tpu.pipeline_mode<synchronous>, transform_indices = @transform_1, window_bounds = array<i64: 16, 32>}, {transform_indices = @transform_2, window_bounds = array<i64: 64, 64>}]} {
    %c0 = arith.constant 0 : index
    %c0_0 = arith.constant 0 : index
    %0 = vector.load %arg1[%c0, %c0_0] : memref<64x16xf32, #tpu.memory_space<vmem>>, vector<64x16xf32>
    %c0_1 = arith.constant 0 : index
    %c0_2 = arith.constant 0 : index
    %1 = vector.load %arg2[%c0_1, %c0_2] : memref<16x32xf32, #tpu.memory_space<vmem>>, vector<16x32xf32>
    %cst = arith.constant dense<0.000000e+00> : vector<64x32xf32>
    %2 = tpu.matmul %0, %1, %cst {dimension_numbers = #tpu.dot_dimension_numbers<[1], [0], [0], [1], [0, 0, 1, 1], [], []>, precision = #tpu.contract_precision<fp32>} : vector<64x16xf32>, vector<16x32xf32>, vector<64x32xf32> -> vector<64x32xf32>
    %c0_3 = arith.constant 0 : index
    %c0_4 = arith.constant 0 : index
    %3 = vector.load %arg3[%c0_3, %c0_4] : memref<64x64xf32, #tpu.memory_space<vmem>>, vector<64x32xf32>
    tpu.vector_store %arg3[%c0_3, %c0_4], %2 {strides = array<i32>} : memref<64x64xf32, #tpu.memory_space<vmem>>, vector<64x32xf32>,
    %c0_5 = arith.constant 0 : index
    %c32 = arith.constant 32 : index
    %4 = vector.load %arg3[%c0_5, %c32] : memref<64x64xf32, #tpu.memory_space<vmem>>, vector<64x32xf32>
    tpu.vector_store %arg3[%c0_5, %c32], %2 {strides = array<i32>} : memref<64x64xf32, #tpu.memory_space<vmem>>, vector<64x32xf32>,
    return
  }
  func.func @transform_0(%arg0: i32) -> (i32, i32) {
    %c0_i32 = arith.constant 0 : i32
    %c0_i32_0 = arith.constant 0 : i32
    return %arg0, %c0_i32 : i32, i32
  }
  func.func @transform_1(%arg0: i32) -> (i32, i32) {
    %c0_i32 = arith.constant 0 : i32
    %c0_i32_0 = arith.constant 0 : i32
    %c0_i32_1 = arith.constant 0 : i32
    return %c0_i32, %c0_i32_0 : i32, i32
  }
  func.func @transform_2(%arg0: i32) -> (i32, i32) {
    %c0_i32 = arith.constant 0 : i32
    %c0_i32_0 = arith.constant 0 : i32
    return %arg0, %c0_i32 : i32, i32
  }
}

</mosaic_0001>

<llo_original>
// kernel: upsample.1
$region0: #{upsample.1}
  #allocation0 [shape = 'u32[]', space=smem, size = 0x4, offset = 0x4, fixed_abs, tag = 'smem constant byte address 0x4 - core index']
  #allocation1 [shape = 'u32[144,128]{1,0:T(1,128)}', space=vmem, size = 0x12000, scoped, tag = 'internal scratch']
  %s0 = inlined_call_operand.hbm [shape: f32[128,16], index: 0, kind: input, shape index: {}]
  %s1 = inlined_call_operand.vmem [shape: f32[16,32], index: 1, kind: input, shape index: {}]
  %s2 = inlined_call_operand.vmem [shape: f32[128,64], index: 2, kind: output, shape index: {}]
  %s3 = sld [smem:[#allocation0]]
  $region45: #{upsample.1} parent=0
    _
  %s5 = ssub.s32 1, %s3
  %s6 = scalar_select 0, %s5, %s3
  $region1: #{upsample.1} parent=0
    #allocation2 [shape = 'u8[65536]{0}', space=vmem, size = 0x10000, scoped, tag = 'input window, operand 0']
    #allocation3 [shape = 's32[2]{0}', space=sflag, size = 0x8, scoped, tag = 'scoped memory for upsample.1']
    %7 = vsyncpa [#allocation3], 0
    %s8 = scalar_lea.sflag [#allocation3], 1
    %9 = vsyncpa %s8, 0
    loop: start=0, step=1, limit=4
    $region2: #{upsample.1} parent=1 // loop_pre_header
      _
    $region3: #{upsample.1} parent=1 // loop_header
      %s11 = sphi 0, %s15
      %p12 = scmp.ge.s32.totalorder %s11, 4
      %s21 = sphi 0, %s23
      %s24 = sphi 0, %s21
      %s25 = sphi 0, %s24
      %s41 = sphi 0, %s25
      %s45 = sphi 0, %s45
      %s47 = sphi 0, %s45
      %s48 = sphi 0, %s47
      %s62 = sphi 0, %s48
      %s68 = sphi 0, %s70
      %s71 = sphi 0, %s68
      %s72 = sphi 0, %s71
      %s88 = sphi 0, %s72
    $region4: #{upsample.1} parent=1 // loop_header_branch
      %14 = sbr.rel (%p12) target = $region8
    $region5: #{upsample.1} parent=1 // loop_body
      %s16 = ssub.s32 %s11, 1
      %s17 = ssub.s32 %s11, 2
      %s18 = sadd.s32 %s11, 1
      %s19 = ssub.s32 %s11, %s18
      %p20 = scmp.eq.s32.totalorder %s19, 0
      %s22 = sadd.s32 %s21, 1
      %s23 = scalar_select %p20, %s21, %s22
      %p26 = pneg %p20
      %p27 = scmp.eq.s32.totalorder %s11, 1
      %p28 = por %p26, %p27
      %p29 = scmp.ne.s32.totalorder %s21, %s24
      %p30 = scmp.eq.s32.totalorder %s11, 0
      %p31 = por %p29, %p30
      %p32 = scmp.ne.s32.totalorder %s21, %s24
      %p33 = scmp.eq.s32.totalorder %s16, 1
      %p34 = por %p32, %p33
      %p35 = scmp.ne.s32.totalorder %s24, %s25
      %p36 = scmp.eq.s32.totalorder %s16, 0
      %p37 = por %p35, %p36
      %p38 = scmp.ne.s32.totalorder %s24, %s25
      %p39 = scmp.eq.s32.totalorder %s17, 1
      %p40 = por %p38, %p39
      %p42 = scmp.ne.s32.totalorder %s25, %s41
      %p43 = scmp.eq.s32.totalorder %s17, 0
      %p44 = por %p42, %p43
      %s46 = sadd.s32 %s45, 1
      %p49 = scmp.eq.s32.totalorder %s11, 1
      %p50 = scmp.ne.s32.totalorder %s45, %s47
      %p51 = scmp.eq.s32.totalorder %s11, 0
      %p52 = por %p50, %p51
      %p53 = scmp.ne.s32.totalorder %s45, %s47
      %p54 = scmp.eq.s32.totalorder %s16, 1
      %p55 = por %p53, %p54
      %p56 = scmp.ne.s32.totalorder %s47, %s48
      %p57 = scmp.eq.s32.totalorder %s16, 0
      %p58 = por %p56, %p57
      %p59 = scmp.ne.s32.totalorder %s47, %s48
      %p60 = scmp.eq.s32.totalorder %s17, 1
      %p61 = por %p59, %p60
      %p63 = scmp.ne.s32.totalorder %s48, %s62
      %p64 = scmp.eq.s32.totalorder %s17, 0
      %p65 = por %p63, %p64
      %s66 = ssub.s32 %s11, %s18
      %p67 = scmp.eq.s32.totalorder %s66, 0
      %s69 = sadd.s32 %s68, 1
      %s70 = scalar_select %p67, %s68, %s69
      %p73 = pneg %p67
      %p74 = scmp.eq.s32.totalorder %s11, 1
      %p75 = por %p73, %p74
      %p76 = scmp.ne.s32.totalorder %s68, %s71
      %p77 = scmp.eq.s32.totalorder %s11, 0
      %p78 = por %p76, %p77
      %p79 = scmp.ne.s32.totalorder %s68, %s71
      %p80 = scmp.eq.s32.totalorder %s16, 1
      %p81 = por %p79, %p80
      %p82 = scmp.ne.s32.totalorder %s71, %s72
      %p83 = scmp.eq.s32.totalorder %s16, 0
      %p84 = por %p82, %p83
      %p85 = scmp.ne.s32.totalorder %s71, %s72
      %p86 = scmp.eq.s32.totalorder %s17, 1
      %p87 = por %p85, %p86
      %p89 = scmp.ne.s32.totalorder %s72, %s88
      %p90 = scmp.eq.s32.totalorder %s17, 0
      %p91 = por %p89, %p90
      %p92 = scmp.le.s32.totalorder 1, %s11
      %p93 = scmp.lt.s32.totalorder %s11, 3
      %p94 = pnand %p92, %p93
      %p95 = pneg %p94
      // Predicated region
      $region9: #{upsample.1} parent=5 // pred_check
        _
      $region10: #{upsample.1} parent=5 // pred_check_branch
        %97 = sbr.rel (%p94) target = $region12
      $region11: #{upsample.1} parent=5 // pred_region
        %s98 = ssub.s32 %s11, 1
        // Predicated region
        $region13: #{upsample.1} parent=11 // pred_check
          %p99 = pneg %p58
        $region14: #{upsample.1} parent=11 // pred_check_branch
          %101 = sbr.rel (%p99) target = $region16
        $region15: #{upsample.1} parent=11 // pred_region
          _
        $region16: #{upsample.1} parent=11 // pred_fallthru
          _
      $region12: #{upsample.1} parent=5 // pred_fallthru
        _
      %p102 = scmp.lt.s32.totalorder %s11, 2
      // Predicated region
      $region17: #{upsample.1} parent=5 // pred_check
        %p103 = pneg %p102
      $region18: #{upsample.1} parent=5 // pred_check_branch
        %105 = sbr.rel (%p103) target = $region20
      $region19: #{upsample.1} parent=5 // pred_region
        // Predicated region
        $region21: #{upsample.1} parent=19 // pred_check
          %p106 = pneg %p31
        $region22: #{upsample.1} parent=19 // pred_check_branch
          %108 = sbr.rel (%p106) target = $region24
        $region23: #{upsample.1} parent=19 // pred_region
          %s109 = sand.u32 %s21, 1
          %s110 = scalar_lea.sflag [#allocation3], %s109
          %s111 = sand.u32 %s21, 1
          %s112 = smul.addr %s111, 64
          %s113 = scalar_lea.vmem [#allocation2], %s112
          %s114 = smul.u32 8, %s11
          %s116 = ssub.s32 1024, 1024
          %117 = vsyncadd %s110, %s116
          %s118 = smul.addr %s114, 128
          %s119 = scalar_lea.hbm %s0, %s118
          %s120 = sshll.u32 %s113, 4
          %s121 = int_to_ptr.vmem [resolvable:$true] %s120
          %126 = dma.hbm_to_vmem [thread:$0]  %s119, 1024, %s121, %s110, 128, 128, 8
        $region24: #{upsample.1} parent=19 // pred_fallthru
          _
      $region20: #{upsample.1} parent=5 // pred_fallthru
        _
      %p127 = scmp.le.s32.totalorder 1, %s11
      %p128 = scmp.lt.s32.totalorder %s11, 3
      %p129 = pnand %p127, %p128
      %p130 = pneg %p129
      // Predicated region
      $region25: #{upsample.1} parent=5 // pred_check
        _
      $region26: #{upsample.1} parent=5 // pred_check_branch
        %132 = sbr.rel (%p129) target = $region28
      $region27: #{upsample.1} parent=5 // pred_region
        %s133 = ssub.s32 %s11, 1
        %s134 = sand.u32 %s24, 1
        %s135 = scalar_lea.sflag [#allocation3], %s134
        %s136 = sand.u32 %s24, 1
        %s137 = smul.addr %s136, 64
        %s138 = scalar_lea.vmem [#allocation2], %s137
        // Predicated region
        $region29: #{upsample.1} parent=27 // pred_check
          %p139 = pneg %p37
        $region30: #{upsample.1} parent=27 // pred_check_branch
          %141 = sbr.rel (%p139) target = $region32
        $region31: #{upsample.1} parent=27 // pred_region
          %142 = dma.done %s135, 1024
        $region32: #{upsample.1} parent=27 // pred_fallthru
          _
        %s143 = sand.u32 %s24, 1
        %s144 = scalar_lea.sflag [#allocation3], %s143
        %s145 = sand.u32 %s24, 1
        %s146 = smul.addr %s145, 64
        %s147 = scalar_lea.vmem [#allocation2], %s146
        %p148 = pneg %p37
        %p149 = pneg %p34
        %p150 = pneg %p58
        %p151 = pneg %p55
        %p152 = pneg %p84
        %p153 = pneg %p81
        %s154 = smul.u32 8, %s16
        %p155 = scmp.lt.s32.totalorder %s154, 15
        %s156 = scalar_select %p155, %s154, 15
        %s157 = smul.addr %s156, 8
        %s158 = scalar_lea.vmem %s2, %s157
        %s159 = smul.u32 8, %s16
        %s160 = smul.u32 8, %s16
        %p161 = scmp.lt.s32.totalorder %s160, 15
        %s162 = scalar_select %p161, %s160, 15
        %s163 = smul.addr %s162, 8
        %s164 = scalar_lea.vmem %s2, %s163
        %s165 = smul.u32 8, %s16
        %v166 = vld [vmem:[%s138] sm:$0xff]
        %v167 = vld [vmem:[%s138 + $0x8] sm:$0xff]
        %v168 = vld [vmem:[%s138 + $0x10] sm:$0xff]
        %v169 = vld [vmem:[%s138 + $0x18] sm:$0xff]
        %v170 = vld [vmem:[%s138 + $0x20] sm:$0xff]
        %v171 = vld [vmem:[%s138 + $0x28] sm:$0xff]
        %v172 = vld [vmem:[%s138 + $0x30] sm:$0xff]
        %v173 = vld [vmem:[%s138 + $0x38] sm:$0xff]
        %v174 = vld [vmem:[%s1] sm:$0xff]
        %v175 = vld [vmem:[%s1 + $0x8] sm:$0xff]
        %vm176 = vcmask 130048
        %v178 = vsel %vm176, %v166, 0
        %v181 = vsel %vm176, %v167, 0
        %v184 = vsel %vm176, %v168, 0
        %v187 = vsel %vm176, %v169, 0
        %v190 = vsel %vm176, %v170, 0
        %v193 = vsel %vm176, %v171, 0
        %v196 = vsel %vm176, %v172, 0
        %v199 = vsel %vm176, %v173, 0
        %201 = vmatprep.subr.mxu0 0.0
        %v202 = vand.u32 %v174, 4294901760
        %203 = vmatpush1.msra.mxu0 %v202
        %204 = vmatprep.subr.mxu0 0.0
        %v205 = vand.u32 %v175, 4294901760
        %206 = vmatpush1.msra.mxu0 %v205
        %207 = vmatprep.subr.mxu0 0.0
        %208 = vmatpush1.msra.mxu0 0.0
        %209 = vmatprep.subr.mxu0 0.0
        %210 = vmatpush1.msra.mxu0 0.0
        %211 = vmatprep.subr.mxu0 0.0
        %212 = vmatpush1.msra.mxu0 0.0
        %213 = vmatprep.subr.mxu0 0.0
        %214 = vmatpush1.msra.mxu0 0.0
        %215 = vmatprep.subr.mxu0 0.0
        %216 = vmatpush1.msra.mxu0 0.0
        %217 = vmatprep.subr.mxu0 0.0
        %218 = vmatpush1.msra.mxu0 0.0
        %219 = vmatprep.subr.mxu0 0.0
        %220 = vmatpush1.msra.mxu0 0.0
        %221 = vmatprep.subr.mxu0 0.0
        %222 = vmatpush1.msra.mxu0 0.0
        %223 = vmatprep.subr.mxu0 0.0
        %224 = vmatpush1.msra.mxu0 0.0
        %225 = vmatprep.subr.mxu0 0.0
        %226 = vmatpush1.msra.mxu0 0.0
        %227 = vmatprep.subr.mxu0 0.0
        %228 = vmatpush1.msra.mxu0 0.0
        %229 = vmatprep.subr.mxu0 0.0
        %230 = vmatpush1.msra.mxu0 0.0
        %231 = vmatprep.subr.mxu0 0.0
        %232 = vmatpush1.msra.mxu0 0.0
        %233 = vmatprep.subr.mxu0 0.0
        %234 = vmatpush1.msra.mxu0 0.0
        %235 = vmatprep.subr.mxu0 0.0
        %236 = vmatpush1.msra.mxu0 0.0
        %237 = vmatprep.subr.mxu0 0.0
        %238 = vmatpush1.msra.mxu0 0.0
        %239 = vmatprep.subr.mxu0 0.0
        %240 = vmatpush1.msra.mxu0 0.0
        %241 = vmatprep.subr.mxu0 0.0
        %242 = vmatpush1.msra.mxu0 0.0
        %243 = vmatprep.subr.mxu0 0.0
        %244 = vmatpush1.msra.mxu0 0.0
        %245 = vmatprep.subr.mxu0 0.0
        %246 = vmatpush1.msra.mxu0 0.0
        %247 = vmatprep.subr.mxu0 0.0
        %248 = vmatpush1.msra.mxu0 0.0
        %249 = vmatprep.subr.mxu0 0.0
        %250 = vmatpush1.msra.mxu0 0.0
        %251 = vmatprep.subr.mxu0 0.0
        %252 = vmatpush1.msra.mxu0 0.0
        %253 = vmatprep.subr.mxu0 0.0
        %254 = vmatpush1.msra.mxu0 0.0
        %255 = vmatprep.subr.mxu0 0.0
        %256 = vmatpush1.msra.mxu0 0.0
        %257 = vmatprep.subr.mxu0 0.0
        %258 = vmatpush1.msra.mxu0 0.0
        %259 = vmatprep.subr.mxu0 0.0
        %260 = vmatpush1.msra.mxu0 0.0
        %261 = vmatprep.subr.mxu0 0.0
        %262 = vmatpush1.msra.mxu0 0.0
        %263 = vmatprep.subr.mxu0 0.0
        %264 = vmatpush1.msra.mxu0 0.0
        %265 = vmatprep.subr.mxu0 0.0
        %266 = vmatpush1.msra.mxu0 0.0
        %267 = vmatprep.mubr.f32.mxu0 0.0
        %v268 = vand.u32 %v178, 4294901760
        %v269 = vsub.f32 %v178, %v268
        %v270 = vand.u32 %v269, 4294901760
        %v271 = vsub.f32 %v269, %v270
        %v272 = vand.u32 %v271, 4294901760
        %273 = vmatmul.mubr.f32.gmra.mrb[0].mxu0 %v272
        %v274 = vpop.f32.mrb[0].mxu0
        %v275 = vadd.f32 0.0, %v274
        %v276 = vpop.f32.mrb[0].mxu0
        %277 = vmatprep.mubr.f32.mxu0 0.0
        %v278 = vand.u32 %v181, 4294901760
        %v279 = vsub.f32 %v181, %v278
        %v280 = vand.u32 %v279, 4294901760
        %v281 = vsub.f32 %v279, %v280
        %v282 = vand.u32 %v281, 4294901760
        %283 = vmatmul.mubr.f32.gmra.mrb[0].mxu0 %v282
        %v284 = vpop.f32.mrb[0].mxu0
        %v285 = vadd.f32 0.0, %v284
        %v286 = vpop.f32.mrb[0].mxu0
        %287 = vmatprep.mubr.f32.mxu0 0.0
        %v288 = vand.u32 %v184, 4294901760
        %v289 = vsub.f32 %v184, %v288
        %v290 = vand.u32 %v289, 4294901760
        %v291 = vsub.f32 %v289, %v290
        %v292 = vand.u32 %v291, 4294901760
        %293 = vmatmul.mubr.f32.gmra.mrb[0].mxu0 %v292
        %v294 = vpop.f32.mrb[0].mxu0
        %v295 = vadd.f32 0.0, %v294
        %v296 = vpop.f32.mrb[0].mxu0
        %297 = vmatprep.mubr.f32.mxu0 0.0
        %v298 = vand.u32 %v187, 4294901760
        %v299 = vsub.f32 %v187, %v298
        %v300 = vand.u32 %v299, 4294901760
        %v301 = vsub.f32 %v299, %v300
        %v302 = vand.u32 %v301, 4294901760
        %303 = vmatmul.mubr.f32.gmra.mrb[0].mxu0 %v302
        %v304 = vpop.f32.mrb[0].mxu0
        %v305 = vadd.f32 0.0, %v304
        %v306 = vpop.f32.mrb[0].mxu0
        %307 = vmatprep.mubr.f32.mxu0 0.0
        %v308 = vand.u32 %v190, 4294901760
        %v309 = vsub.f32 %v190, %v308
        %v310 = vand.u32 %v309, 4294901760
        %v311 = vsub.f32 %v309, %v310
        %v312 = vand.u32 %v311, 4294901760
        %313 = vmatmul.mubr.f32.gmra.mrb[0].mxu0 %v312
        %v314 = vpop.f32.mrb[0].mxu0
        %v315 = vadd.f32 0.0, %v314
        %v316 = vpop.f32.mrb[0].mxu0
        %317 = vmatprep.mubr.f32.mxu0 0.0
        %v318 = vand.u32 %v193, 4294901760
        %v319 = vsub.f32 %v193, %v318
        %v320 = vand.u32 %v319, 4294901760
        %v321 = vsub.f32 %v319, %v320
        %v322 = vand.u32 %v321, 4294901760
        %323 = vmatmul.mubr.f32.gmra.mrb[0].mxu0 %v322
        %v324 = vpop.f32.mrb[0].mxu0
        %v325 = vadd.f32 0.0, %v324
        %v326 = vpop.f32.mrb[0].mxu0
        %327 = vmatprep.mubr.f32.mxu0 0.0
        %v328 = vand.u32 %v196, 4294901760
        %v329 = vsub.f32 %v196, %v328
        %v330 = vand.u32 %v329, 4294901760
        %v331 = vsub.f32 %v329, %v330
        %v332 = vand.u32 %v331, 4294901760
        %333 = vmatmul.mubr.f32.gmra.mrb[0].mxu0 %v332
        %v334 = vpop.f32.mrb[0].mxu0
        %v335 = vadd.f32 0.0, %v334
        %v336 = vpop.f32.mrb[0].mxu0
        %337 = vmatprep.mubr.f32.mxu0 0.0
        %v338 = vand.u32 %v199, 4294901760
        %v339 = vsub.f32 %v199, %v338
        %v340 = vand.u32 %v339, 4294901760
        %v341 = vsub.f32 %v339, %v340
        %v342 = vand.u32 %v341, 4294901760
        %343 = vmatmul.mubr.f32.gmra.mrb[0].mxu0 %v342
        %v344 = vpop.f32.mrb[0].mxu0
        %v345 = vadd.f32 0.0, %v344
        %v346 = vpop.f32.mrb[0].mxu0
        %347 = vdwg.mxu0
        %348 = vmatprep.subr.mxu0 0.0
        %v349 = vand.u32 %v174, 4294901760
        %v350 = vsub.f32 %v174, %v349
        %v351 = vand.u32 %v350, 4294901760
        %v352 = vsub.f32 %v350, %v351
        %v353 = vand.u32 %v352, 4294901760
        %354 = vmatpush1.msra.mxu0 %v353
        %355 = vmatprep.subr.mxu0 0.0
        %v356 = vand.u32 %v175, 4294901760
        %v357 = vsub.f32 %v175, %v356
        %v358 = vand.u32 %v357, 4294901760
        %v359 = vsub.f32 %v357, %v358
        %v360 = vand.u32 %v359, 4294901760
        %361 = vmatpush1.msra.mxu0 %v360
        %362 = vmatprep.subr.mxu0 0.0
        %363 = vmatpush1.msra.mxu0 0.0
        %364 = vmatprep.subr.mxu0 0.0
        %365 = vmatpush1.msra.mxu0 0.0
        %366 = vmatprep.subr.mxu0 0.0
        %367 = vmatpush1.msra.mxu0 0.0
        %368 = vmatprep.subr.mxu0 0.0
        %369 = vmatpush1.msra.mxu0 0.0
        %370 = vmatprep.subr.mxu0 0.0
        %371 = vmatpush1.msra.mxu0 0.0
        %372 = vmatprep.subr.mxu0 0.0
        %373 = vmatpush1.msra.mxu0 0.0
        %374 = vmatprep.subr.mxu0 0.0
        %375 = vmatpush1.msra.mxu0 0.0
        %376 = vmatprep.subr.mxu0 0.0
        %377 = vmatpush1.msra.mxu0 0.0
        %378 = vmatprep.subr.mxu0 0.0
        %379 = vmatpush1.msra.mxu0 0.0
        %380 = vmatprep.subr.mxu0 0.0
        %381 = vmatpush1.msra.mxu0 0.0
        %382 = vmatprep.subr.mxu0 0.0
        %383 = vmatpush1.msra.mxu0 0.0
        %384 = vmatprep.subr.mxu0 0.0
        %385 = vmatpush1.msra.mxu0 0.0
        %386 = vmatprep.subr.mxu0 0.0
        %387 = vmatpush1.msra.mxu0 0.0
        %388 = vmatprep.subr.mxu0 0.0
        %389 = vmatpush1.msra.mxu0 0.0
        %390 = vmatprep.subr.mxu0 0.0
        %391 = vmatpush1.msra.mxu0 0.0
        %392 = vmatprep.subr.mxu0 0.0
        %393 = vmatpush1.msra.mxu0 0.0
        %394 = vmatprep.subr.mxu0 0.0
        %395 = vmatpush1.msra.mxu0 0.0
        %396 = vmatprep.subr.mxu0 0.0
        %397 = vmatpush1.msra.mxu0 0.0
        %398 = vmatprep.subr.mxu0 0.0
        %399 = vmatpush1.msra.mxu0 0.0
        %400 = vmatprep.subr.mxu0 0.0
        %401 = vmatpush1.msra.mxu0 0.0
        %402 = vmatprep.subr.mxu0 0.0
        %403 = vmatpush1.msra.mxu0 0.0
        %404 = vmatprep.subr.mxu0 0.0
        %405 = vmatpush1.msra.mxu0 0.0
        %406 = vmatprep.subr.mxu0 0.0
        %407 = vmatpush1.msra.mxu0 0.0
        %408 = vmatprep.subr.mxu0 0.0
        %409 = vmatpush1.msra.mxu0 0.0
        %410 = vmatprep.subr.mxu0 0.0
        %411 = vmatpush1.msra.mxu0 0.0
        %412 = vmatprep.subr.mxu0 0.0
        %413 = vmatpush1.msra.mxu0 0.0
        %414 = vmatprep.subr.mxu0 0.0
        %415 = vmatpush1.msra.mxu0 0.0
        %416 = vmatprep.subr.mxu0 0.0
        %417 = vmatpush1.msra.mxu0 0.0
        %418 = vmatprep.subr.mxu0 0.0
        %419 = vmatpush1.msra.mxu0 0.0
        %420 = vmatprep.subr.mxu0 0.0
        %421 = vmatpush1.msra.mxu0 0.0
        %422 = vmatprep.mubr.f32.mxu0 0.0
        %v423 = vand.u32 %v178, 4294901760
        %424 = vmatmul.mubr.f32.gmra.mrb[0].mxu0 %v423
        %v425 = vpop.f32.mrb[0].mxu0
        %v426 = vadd.f32 %v275, %v425
        %v427 = vpop.f32.mrb[0].mxu0
        %428 = vmatprep.mubr.f32.mxu0 0.0
        %v429 = vand.u32 %v181, 4294901760
        %430 = vmatmul.mubr.f32.gmra.mrb[0].mxu0 %v429
        %v431 = vpop.f32.mrb[0].mxu0
        %v432 = vadd.f32 %v285, %v431
        %v433 = vpop.f32.mrb[0].mxu0
        %434 = vmatprep.mubr.f32.mxu0 0.0
        %v435 = vand.u32 %v184, 4294901760
        %436 = vmatmul.mubr.f32.gmra.mrb[0].mxu0 %v435
        %v437 = vpop.f32.mrb[0].mxu0
        %v438 = vadd.f32 %v295, %v437
        %v439 = vpop.f32.mrb[0].mxu0
        %440 = vmatprep.mubr.f32.mxu0 0.0
        %v441 = vand.u32 %v187, 4294901760
        %442 = vmatmul.mubr.f32.gmra.mrb[0].mxu0 %v441
        %v443 = vpop.f32.mrb[0].mxu0
        %v444 = vadd.f32 %v305, %v443
        %v445 = vpop.f32.mrb[0].mxu0
        %446 = vmatprep.mubr.f32.mxu0 0.0
        %v447 = vand.u32 %v190, 4294901760
        %448 = vmatmul.mubr.f32.gmra.mrb[0].mxu0 %v447
        %v449 = vpop.f32.mrb[0].mxu0
        %v450 = vadd.f32 %v315, %v449
        %v451 = vpop.f32.mrb[0].mxu0
        %452 = vmatprep.mubr.f32.mxu0 0.0
        %v453 = vand.u32 %v193, 4294901760
        %454 = vmatmul.mubr.f32.gmra.mrb[0].mxu0 %v453
        %v455 = vpop.f32.mrb[0].mxu0
        %v456 = vadd.f32 %v325, %v455
        %v457 = vpop.f32.mrb[0].mxu0
        %458 = vmatprep.mubr.f32.mxu0 0.0
        %v459 = vand.u32 %v196, 4294901760
        %460 = vmatmul.mubr.f32.gmra.mrb[0].mxu0 %v459
        %v461 = vpop.f32.mrb[0].mxu0
        %v462 = vadd.f32 %v335, %v461
        %v463 = vpop.f32.mrb[0].mxu0
        %464 = vmatprep.mubr.f32.mxu0 0.0
        %v465 = vand.u32 %v199, 4294901760
        %466 = vmatmul.mubr.f32.gmra.mrb[0].mxu0 %v465
        %v467 = vpop.f32.mrb[0].mxu0
        %v468 = vadd.f32 %v345, %v467
        %v469 = vpop.f32.mrb[0].mxu0
        %470 = vdwg.mxu0
        %471 = vmatprep.subr.mxu0 0.0
        %v472 = vand.u32 %v174, 4294901760
        %v473 = vsub.f32 %v174, %v472
        %474 = vmatpush1.msra.mxu0 %v473
        %475 = vmatprep.subr.mxu0 0.0
        %v476 = vand.u32 %v175, 4294901760
        %v477 = vsub.f32 %v175, %v476
        %478 = vmatpush1.msra.mxu0 %v477
        %479 = vmatprep.subr.mxu0 0.0
        %480 = vmatpush1.msra.mxu0 0.0
        %481 = vmatprep.subr.mxu0 0.0
        %482 = vmatpush1.msra.mxu0 0.0
        %483 = vmatprep.subr.mxu0 0.0
        %484 = vmatpush1.msra.mxu0 0.0
        %485 = vmatprep.subr.mxu0 0.0
        %486 = vmatpush1.msra.mxu0 0.0
        %487 = vmatprep.subr.mxu0 0.0
        %488 = vmatpush1.msra.mxu0 0.0
        %489 = vmatprep.subr.mxu0 0.0
        %490 = vmatpush1.msra.mxu0 0.0
        %491 = vmatprep.subr.mxu0 0.0
        %492 = vmatpush1.msra.mxu0 0.0
        %493 = vmatprep.subr.mxu0 0.0
        %494 = vmatpush1.msra.mxu0 0.0
        %495 = vmatprep.subr.mxu0 0.0
        %496 = vmatpush1.msra.mxu0 0.0
        %497 = vmatprep.subr.mxu0 0.0
        %498 = vmatpush1.msra.mxu0 0.0
        %499 = vmatprep.subr.mxu0 0.0
        %500 = vmatpush1.msra.mxu0 0.0
        %501 = vmatprep.subr.mxu0 0.0
        %502 = vmatpush1.msra.mxu0 0.0
        %503 = vmatprep.subr.mxu0 0.0
        %504 = vmatpush1.msra.mxu0 0.0
        %505 = vmatprep.subr.mxu0 0.0
        %506 = vmatpush1.msra.mxu0 0.0
        %507 = vmatprep.subr.mxu0 0.0
        %508 = vmatpush1.msra.mxu0 0.0
        %509 = vmatprep.subr.mxu0 0.0
        %510 = vmatpush1.msra.mxu0 0.0
        %511 = vmatprep.subr.mxu0 0.0
        %512 = vmatpush1.msra.mxu0 0.0
        %513 = vmatprep.subr.mxu0 0.0
        %514 = vmatpush1.msra.mxu0 0.0
        %515 = vmatprep.subr.mxu0 0.0
        %516 = vmatpush1.msra.mxu0 0.0
        %517 = vmatprep.subr.mxu0 0.0
        %518 = vmatpush1.msra.mxu0 0.0
        %519 = vmatprep.subr.mxu0 0.0
        %520 = vmatpush1.msra.mxu0 0.0
        %521 = vmatprep.subr.mxu0 0.0
        %522 = vmatpush1.msra.mxu0 0.0
        %523 = vmatprep.subr.mxu0 0.0
        %524 = vmatpush1.msra.mxu0 0.0
        %525 = vmatprep.subr.mxu0 0.0
        %526 = vmatpush1.msra.mxu0 0.0
        %527 = vmatprep.subr.mxu0 0.0
        %528 = vmatpush1.msra.mxu0 0.0
        %529 = vmatprep.subr.mxu0 0.0
        %530 = vmatpush1.msra.mxu0 0.0
        %531 = vmatprep.subr.mxu0 0.0
        %532 = vmatpush1.msra.mxu0 0.0
        %533 = vmatprep.subr.mxu0 0.0
        %534 = vmatpush1.msra.mxu0 0.0
        %535 = vmatprep.subr.mxu0 0.0
        %536 = vmatpush1.msra.mxu0 0.0
        %537 = vmatprep.subr.mxu0 0.0
        %538 = vmatpush1.msra.mxu0 0.0
        %539 = vmatprep.mubr.f32.mxu0 0.0
        %v540 = vand.u32 %v178, 4294901760
        %v541 = vsub.f32 %v178, %v540
        %542 = vmatmul.mubr.f32.gmra.mrb[0].mxu0 %v541
        %v543 = vpop.f32.mrb[0].mxu0
        %v544 = vadd.f32 %v426, %v543
        %v545 = vpop.f32.mrb[0].mxu0
        %546 = vmatprep.mubr.f32.mxu0 0.0
        %v547 = vand.u32 %v181, 4294901760
        %v548 = vsub.f32 %v181, %v547
        %549 = vmatmul.mubr.f32.gmra.mrb[0].mxu0 %v548
        %v550 = vpop.f32.mrb[0].mxu0
        %v551 = vadd.f32 %v432, %v550
        %v552 = vpop.f32.mrb[0].mxu0
        %553 = vmatprep.mubr.f32.mxu0 0.0
        %v554 = vand.u32 %v184, 4294901760
        %v555 = vsub.f32 %v184, %v554
        %556 = vmatmul.mubr.f32.gmra.mrb[0].mxu0 %v555
        %v557 = vpop.f32.mrb[0].mxu0
        %v558 = vadd.f32 %v438, %v557
        %v559 = vpop.f32.mrb[0].mxu0
        %560 = vmatprep.mubr.f32.mxu0 0.0
        %v561 = vand.u32 %v187, 4294901760
        %v562 = vsub.f32 %v187, %v561
        %563 = vmatmul.mubr.f32.gmra.mrb[0].mxu0 %v562
        %v564 = vpop.f32.mrb[0].mxu0
        %v565 = vadd.f32 %v444, %v564
        %v566 = vpop.f32.mrb[0].mxu0
        %567 = vmatprep.mubr.f32.mxu0 0.0
        %v568 = vand.u32 %v190, 4294901760
        %v569 = vsub.f32 %v190, %v568
        %570 = vmatmul.mubr.f32.gmra.mrb[0].mxu0 %v569
        %v571 = vpop.f32.mrb[0].mxu0
        %v572 = vadd.f32 %v450, %v571
        %v573 = vpop.f32.mrb[0].mxu0
        %574 = vmatprep.mubr.f32.mxu0 0.0
        %v575 = vand.u32 %v193, 4294901760
        %v576 = vsub.f32 %v193, %v575
        %577 = vmatmul.mubr.f32.gmra.mrb[0].mxu0 %v576
        %v578 = vpop.f32.mrb[0].mxu0
        %v579 = vadd.f32 %v456, %v578
        %v580 = vpop.f32.mrb[0].mxu0
        %581 = vmatprep.mubr.f32.mxu0 0.0
        %v582 = vand.u32 %v196, 4294901760
        %v583 = vsub.f32 %v196, %v582
        %584 = vmatmul.mubr.f32.gmra.mrb[0].mxu0 %v583
        %v585 = vpop.f32.mrb[0].mxu0
        %v586 = vadd.f32 %v462, %v585
        %v587 = vpop.f32.mrb[0].mxu0
        %588 = vmatprep.mubr.f32.mxu0 0.0
        %v589 = vand.u32 %v199, 4294901760
        %v590 = vsub.f32 %v199, %v589
        %591 = vmatmul.mubr.f32.gmra.mrb[0].mxu0 %v590
        %v592 = vpop.f32.mrb[0].mxu0
        %v593 = vadd.f32 %v468, %v592
        %v594 = vpop.f32.mrb[0].mxu0
        %595 = vdwg.mxu0
        %596 = vmatprep.subr.mxu0 0.0
        %v597 = vand.u32 %v174, 4294901760
        %598 = vmatpush1.msra.mxu0 %v597
        %599 = vmatprep.subr.mxu0 0.0
        %v600 = vand.u32 %v175, 4294901760
        %601 = vmatpush1.msra.mxu0 %v600
        %602 = vmatprep.subr.mxu0 0.0
        %603 = vmatpush1.msra.mxu0 0.0
        %604 = vmatprep.subr.mxu0 0.0
        %605 = vmatpush1.msra.mxu0 0.0
        %606 = vmatprep.subr.mxu0 0.0
        %607 = vmatpush1.msra.mxu0 0.0
        %608 = vmatprep.subr.mxu0 0.0
        %609 = vmatpush1.msra.mxu0 0.0
        %610 = vmatprep.subr.mxu0 0.0
        %611 = vmatpush1.msra.mxu0 0.0
        %612 = vmatprep.subr.mxu0 0.0
        %613 = vmatpush1.msra.mxu0 0.0
        %614 = vmatprep.subr.mxu0 0.0
        %615 = vmatpush1.msra.mxu0 0.0
        %616 = vmatprep.subr.mxu0 0.0
        %617 = vmatpush1.msra.mxu0 0.0
        %618 = vmatprep.subr.mxu0 0.0
        %619 = vmatpush1.msra.mxu0 0.0
        %620 = vmatprep.subr.mxu0 0.0
        %621 = vmatpush1.msra.mxu0 0.0
        %622 = vmatprep.subr.mxu0 0.0
        %623 = vmatpush1.msra.mxu0 0.0
        %624 = vmatprep.subr.mxu0 0.0
        %625 = vmatpush1.msra.mxu0 0.0
        %626 = vmatprep.subr.mxu0 0.0
        %627 = vmatpush1.msra.mxu0 0.0
        %628 = vmatprep.subr.mxu0 0.0
        %629 = vmatpush1.msra.mxu0 0.0
        %630 = vmatprep.subr.mxu0 0.0
        %631 = vmatpush1.msra.mxu0 0.0
        %632 = vmatprep.subr.mxu0 0.0
        %633 = vmatpush1.msra.mxu0 0.0
        %634 = vmatprep.subr.mxu0 0.0
        %635 = vmatpush1.msra.mxu0 0.0
        %636 = vmatprep.subr.mxu0 0.0
        %637 = vmatpush1.msra.mxu0 0.0
        %638 = vmatprep.subr.mxu0 0.0
        %639 = vmatpush1.msra.mxu0 0.0
        %640 = vmatprep.subr.mxu0 0.0
        %641 = vmatpush1.msra.mxu0 0.0
        %642 = vmatprep.subr.mxu0 0.0
        %643 = vmatpush1.msra.mxu0 0.0
        %644 = vmatprep.subr.mxu0 0.0
        %645 = vmatpush1.msra.mxu0 0.0
        %646 = vmatprep.subr.mxu0 0.0
        %647 = vmatpush1.msra.mxu0 0.0
        %648 = vmatprep.subr.mxu0 0.0
        %649 = vmatpush1.msra.mxu0 0.0
        %650 = vmatprep.subr.mxu0 0.0
        %651 = vmatpush1.msra.mxu0 0.0
        %652 = vmatprep.subr.mxu0 0.0
        %653 = vmatpush1.msra.mxu0 0.0
        %654 = vmatprep.subr.mxu0 0.0
        %655 = vmatpush1.msra.mxu0 0.0
        %656 = vmatprep.subr.mxu0 0.0
        %657 = vmatpush1.msra.mxu0 0.0
        %658 = vmatprep.subr.mxu0 0.0
        %659 = vmatpush1.msra.mxu0 0.0
        %660 = vmatprep.subr.mxu0 0.0
        %661 = vmatpush1.msra.mxu0 0.0
        %662 = vmatprep.mubr.f32.mxu0 0.0
        %v663 = vand.u32 %v178, 4294901760
        %v664 = vsub.f32 %v178, %v663
        %v665 = vand.u32 %v664, 4294901760
        %666 = vmatmul.mubr.f32.gmra.mrb[0].mxu0 %v665
        %v667 = vpop.f32.mrb[0].mxu0
        %v668 = vadd.f32 %v544, %v667
        %v669 = vpop.f32.mrb[0].mxu0
        %670 = vmatprep.mubr.f32.mxu0 0.0
        %v671 = vand.u32 %v181, 4294901760
        %v672 = vsub.f32 %v181, %v671
        %v673 = vand.u32 %v672, 4294901760
        %674 = vmatmul.mubr.f32.gmra.mrb[0].mxu0 %v673
        %v675 = vpop.f32.mrb[0].mxu0
        %v676 = vadd.f32 %v551, %v675
        %v677 = vpop.f32.mrb[0].mxu0
        %678 = vmatprep.mubr.f32.mxu0 0.0
        %v679 = vand.u32 %v184, 4294901760
        %v680 = vsub.f32 %v184, %v679
        %v681 = vand.u32 %v680, 4294901760
        %682 = vmatmul.mubr.f32.gmra.mrb[0].mxu0 %v681
        %v683 = vpop.f32.mrb[0].mxu0
        %v684 = vadd.f32 %v558, %v683
        %v685 = vpop.f32.mrb[0].mxu0
        %686 = vmatprep.mubr.f32.mxu0 0.0
        %v687 = vand.u32 %v187, 4294901760
        %v688 = vsub.f32 %v187, %v687
        %v689 = vand.u32 %v688, 4294901760
        %690 = vmatmul.mubr.f32.gmra.mrb[0].mxu0 %v689
        %v691 = vpop.f32.mrb[0].mxu0
        %v692 = vadd.f32 %v565, %v691
        %v693 = vpop.f32.mrb[0].mxu0
        %694 = vmatprep.mubr.f32.mxu0 0.0
        %v695 = vand.u32 %v190, 4294901760
        %v696 = vsub.f32 %v190, %v695
        %v697 = vand.u32 %v696, 4294901760
        %698 = vmatmul.mubr.f32.gmra.mrb[0].mxu0 %v697
        %v699 = vpop.f32.mrb[0].mxu0
        %v700 = vadd.f32 %v572, %v699
        %v701 = vpop.f32.mrb[0].mxu0
        %702 = vmatprep.mubr.f32.mxu0 0.0
        %v703 = vand.u32 %v193, 4294901760
        %v704 = vsub.f32 %v193, %v703
        %v705 = vand.u32 %v704, 4294901760
        %706 = vmatmul.mubr.f32.gmra.mrb[0].mxu0 %v705
        %v707 = vpop.f32.mrb[0].mxu0
        %v708 = vadd.f32 %v579, %v707
        %v709 = vpop.f32.mrb[0].mxu0
        %710 = vmatprep.mubr.f32.mxu0 0.0
        %v711 = vand.u32 %v196, 4294901760
        %v712 = vsub.f32 %v196, %v711
        %v713 = vand.u32 %v712, 4294901760
        %714 = vmatmul.mubr.f32.gmra.mrb[0].mxu0 %v713
        %v715 = vpop.f32.mrb[0].mxu0
        %v716 = vadd.f32 %v586, %v715
        %v717 = vpop.f32.mrb[0].mxu0
        %718 = vmatprep.mubr.f32.mxu0 0.0
        %v719 = vand.u32 %v199, 4294901760
        %v720 = vsub.f32 %v199, %v719
        %v721 = vand.u32 %v720, 4294901760
        %722 = vmatmul.mubr.f32.gmra.mrb[0].mxu0 %v721
        %v723 = vpop.f32.mrb[0].mxu0
        %v724 = vadd.f32 %v593, %v723
        %v725 = vpop.f32.mrb[0].mxu0
        %726 = vdwg.mxu0
        %727 = vmatprep.subr.mxu0 0.0
        %v728 = vand.u32 %v174, 4294901760
        %v729 = vsub.f32 %v174, %v728
        %v730 = vand.u32 %v729, 4294901760
        %731 = vmatpush1.msra.mxu0 %v730
        %732 = vmatprep.subr.mxu0 0.0
        %v733 = vand.u32 %v175, 4294901760
        %v734 = vsub.f32 %v175, %v733
        %v735 = vand.u32 %v734, 4294901760
        %736 = vmatpush1.msra.mxu0 %v735
        %737 = vmatprep.subr.mxu0 0.0
        %738 = vmatpush1.msra.mxu0 0.0
        %739 = vmatprep.subr.mxu0 0.0
        %740 = vmatpush1.msra.mxu0 0.0
        %741 = vmatprep.subr.mxu0 0.0
        %742 = vmatpush1.msra.mxu0 0.0
        %743 = vmatprep.subr.mxu0 0.0
        %744 = vmatpush1.msra.mxu0 0.0
        %745 = vmatprep.subr.mxu0 0.0
        %746 = vmatpush1.msra.mxu0 0.0
        %747 = vmatprep.subr.mxu0 0.0
        %748 = vmatpush1.msra.mxu0 0.0
        %749 = vmatprep.subr.mxu0 0.0
        %750 = vmatpush1.msra.mxu0 0.0
        %751 = vmatprep.subr.mxu0 0.0
        %752 = vmatpush1.msra.mxu0 0.0
        %753 = vmatprep.subr.mxu0 0.0
        %754 = vmatpush1.msra.mxu0 0.0
        %755 = vmatprep.subr.mxu0 0.0
        %756 = vmatpush1.msra.mxu0 0.0
        %757 = vmatprep.subr.mxu0 0.0
        %758 = vmatpush1.msra.mxu0 0.0
        %759 = vmatprep.subr.mxu0 0.0
        %760 = vmatpush1.msra.mxu0 0.0
        %761 = vmatprep.subr.mxu0 0.0
        %762 = vmatpush1.msra.mxu0 0.0
        %763 = vmatprep.subr.mxu0 0.0
        %764 = vmatpush1.msra.mxu0 0.0
        %765 = vmatprep.subr.mxu0 0.0
        %766 = vmatpush1.msra.mxu0 0.0
        %767 = vmatprep.subr.mxu0 0.0
        %768 = vmatpush1.msra.mxu0 0.0
        %769 = vmatprep.subr.mxu0 0.0
        %770 = vmatpush1.msra.mxu0 0.0
        %771 = vmatprep.subr.mxu0 0.0
        %772 = vmatpush1.msra.mxu0 0.0
        %773 = vmatprep.subr.mxu0 0.0
        %774 = vmatpush1.msra.mxu0 0.0
        %775 = vmatprep.subr.mxu0 0.0
        %776 = vmatpush1.msra.mxu0 0.0
        %777 = vmatprep.subr.mxu0 0.0
        %778 = vmatpush1.msra.mxu0 0.0
        %779 = vmatprep.subr.mxu0 0.0
        %780 = vmatpush1.msra.mxu0 0.0
        %781 = vmatprep.subr.mxu0 0.0
        %782 = vmatpush1.msra.mxu0 0.0
        %783 = vmatprep.subr.mxu0 0.0
        %784 = vmatpush1.msra.mxu0 0.0
        %785 = vmatprep.subr.mxu0 0.0
        %786 = vmatpush1.msra.mxu0 0.0
        %787 = vmatprep.subr.mxu0 0.0
        %788 = vmatpush1.msra.mxu0 0.0
        %789 = vmatprep.subr.mxu0 0.0
        %790 = vmatpush1.msra.mxu0 0.0
        %791 = vmatprep.subr.mxu0 0.0
        %792 = vmatpush1.msra.mxu0 0.0
        %793 = vmatprep.subr.mxu0 0.0
        %794 = vmatpush1.msra.mxu0 0.0
        %795 = vmatprep.subr.mxu0 0.0
        %796 = vmatpush1.msra.mxu0 0.0
        %797 = vmatprep.mubr.f32.mxu0 0.0
        %v798 = vand.u32 %v178, 4294901760
        %799 = vmatmul.mubr.f32.gmra.mrb[0].mxu0 %v798
        %v800 = vpop.f32.mrb[0].mxu0
        %v801 = vadd.f32 %v668, %v800
        %v802 = vpop.f32.mrb[0].mxu0
        %803 = vmatprep.mubr.f32.mxu0 0.0
        %v804 = vand.u32 %v181, 4294901760
        %805 = vmatmul.mubr.f32.gmra.mrb[0].mxu0 %v804
        %v806 = vpop.f32.mrb[0].mxu0
        %v807 = vadd.f32 %v676, %v806
        %v808 = vpop.f32.mrb[0].mxu0
        %809 = vmatprep.mubr.f32.mxu0 0.0
        %v810 = vand.u32 %v184, 4294901760
        %811 = vmatmul.mubr.f32.gmra.mrb[0].mxu0 %v810
        %v812 = vpop.f32.mrb[0].mxu0
        %v813 = vadd.f32 %v684, %v812
        %v814 = vpop.f32.mrb[0].mxu0
        %815 = vmatprep.mubr.f32.mxu0 0.0
        %v816 = vand.u32 %v187, 4294901760
        %817 = vmatmul.mubr.f32.gmra.mrb[0].mxu0 %v816
        %v818 = vpop.f32.mrb[0].mxu0
        %v819 = vadd.f32 %v692, %v818
        %v820 = vpop.f32.mrb[0].mxu0
        %821 = vmatprep.mubr.f32.mxu0 0.0
        %v822 = vand.u32 %v190, 4294901760
        %823 = vmatmul.mubr.f32.gmra.mrb[0].mxu0 %v822
        %v824 = vpop.f32.mrb[0].mxu0
        %v825 = vadd.f32 %v700, %v824
        %v826 = vpop.f32.mrb[0].mxu0
        %827 = vmatprep.mubr.f32.mxu0 0.0
        %v828 = vand.u32 %v193, 4294901760
        %829 = vmatmul.mubr.f32.gmra.mrb[0].mxu0 %v828
        %v830 = vpop.f32.mrb[0].mxu0
        %v831 = vadd.f32 %v708, %v830
        %v832 = vpop.f32.mrb[0].mxu0
        %833 = vmatprep.mubr.f32.mxu0 0.0
        %v834 = vand.u32 %v196, 4294901760
        %835 = vmatmul.mubr.f32.gmra.mrb[0].mxu0 %v834
        %v836 = vpop.f32.mrb[0].mxu0
        %v837 = vadd.f32 %v716, %v836
        %v838 = vpop.f32.mrb[0].mxu0
        %839 = vmatprep.mubr.f32.mxu0 0.0
        %v840 = vand.u32 %v199, 4294901760
        %841 = vmatmul.mubr.f32.gmra.mrb[0].mxu0 %v840
        %v842 = vpop.f32.mrb[0].mxu0
        %v843 = vadd.f32 %v724, %v842
        %v844 = vpop.f32.mrb[0].mxu0
        %845 = vdwg.mxu0
        %846 = vmatprep.subr.mxu0 0.0
        %v847 = vand.u32 %v174, 4294901760
        %848 = vmatpush1.msra.mxu0 %v847
        %849 = vmatprep.subr.mxu0 0.0
        %v850 = vand.u32 %v175, 4294901760
        %851 = vmatpush1.msra.mxu0 %v850
        %852 = vmatprep.subr.mxu0 0.0
        %853 = vmatpush1.msra.mxu0 0.0
        %854 = vmatprep.subr.mxu0 0.0
        %855 = vmatpush1.msra.mxu0 0.0
        %856 = vmatprep.subr.mxu0 0.0
        %857 = vmatpush1.msra.mxu0 0.0
        %858 = vmatprep.subr.mxu0 0.0
        %859 = vmatpush1.msra.mxu0 0.0
        %860 = vmatprep.subr.mxu0 0.0
        %861 = vmatpush1.msra.mxu0 0.0
        %862 = vmatprep.subr.mxu0 0.0
        %863 = vmatpush1.msra.mxu0 0.0
        %864 = vmatprep.subr.mxu0 0.0
        %865 = vmatpush1.msra.mxu0 0.0
        %866 = vmatprep.subr.mxu0 0.0
        %867 = vmatpush1.msra.mxu0 0.0
        %868 = vmatprep.subr.mxu0 0.0
        %869 = vmatpush1.msra.mxu0 0.0
        %870 = vmatprep.subr.mxu0 0.0
        %871 = vmatpush1.msra.mxu0 0.0
        %872 = vmatprep.subr.mxu0 0.0
        %873 = vmatpush1.msra.mxu0 0.0
        %874 = vmatprep.subr.mxu0 0.0
        %875 = vmatpush1.msra.mxu0 0.0
        %876 = vmatprep.subr.mxu0 0.0
        %877 = vmatpush1.msra.mxu0 0.0
        %878 = vmatprep.subr.mxu0 0.0
        %879 = vmatpush1.msra.mxu0 0.0
        %880 = vmatprep.subr.mxu0 0.0
        %881 = vmatpush1.msra.mxu0 0.0
        %882 = vmatprep.subr.mxu0 0.0
        %883 = vmatpush1.msra.mxu0 0.0
        %884 = vmatprep.subr.mxu0 0.0
        %885 = vmatpush1.msra.mxu0 0.0
        %886 = vmatprep.subr.mxu0 0.0
        %887 = vmatpush1.msra.mxu0 0.0
        %888 = vmatprep.subr.mxu0 0.0
        %889 = vmatpush1.msra.mxu0 0.0
        %890 = vmatprep.subr.mxu0 0.0
        %891 = vmatpush1.msra.mxu0 0.0
        %892 = vmatprep.subr.mxu0 0.0
        %893 = vmatpush1.msra.mxu0 0.0
        %894 = vmatprep.subr.mxu0 0.0
        %895 = vmatpush1.msra.mxu0 0.0
        %896 = vmatprep.subr.mxu0 0.0
        %897 = vmatpush1.msra.mxu0 0.0
        %898 = vmatprep.subr.mxu0 0.0
        %899 = vmatpush1.msra.mxu0 0.0
        %900 = vmatprep.subr.mxu0 0.0
        %901 = vmatpush1.msra.mxu0 0.0
        %902 = vmatprep.subr.mxu0 0.0
        %903 = vmatpush1.msra.mxu0 0.0
        %904 = vmatprep.subr.mxu0 0.0
        %905 = vmatpush1.msra.mxu0 0.0
        %906 = vmatprep.subr.mxu0 0.0
        %907 = vmatpush1.msra.mxu0 0.0
        %908 = vmatprep.subr.mxu0 0.0
        %909 = vmatpush1.msra.mxu0 0.0
        %910 = vmatprep.subr.mxu0 0.0
        %911 = vmatpush1.msra.mxu0 0.0
        %912 = vmatprep.mubr.f32.mxu0 0.0
        %v913 = vand.u32 %v178, 4294901760
        %914 = vmatmul.mubr.f32.gmra.mrb[0].mxu0 %v913
        %v915 = vpop.f32.mrb[0].mxu0
        %v916 = vadd.f32 %v801, %v915
        %v917 = vpop.f32.mrb[0].mxu0
        %918 = vmatprep.mubr.f32.mxu0 0.0
        %v919 = vand.u32 %v181, 4294901760
        %920 = vmatmul.mubr.f32.gmra.mrb[0].mxu0 %v919
        %v921 = vpop.f32.mrb[0].mxu0
        %v922 = vadd.f32 %v807, %v921
        %v923 = vpop.f32.mrb[0].mxu0
        %924 = vmatprep.mubr.f32.mxu0 0.0
        %v925 = vand.u32 %v184, 4294901760
        %926 = vmatmul.mubr.f32.gmra.mrb[0].mxu0 %v925
        %v927 = vpop.f32.mrb[0].mxu0
        %v928 = vadd.f32 %v813, %v927
        %v929 = vpop.f32.mrb[0].mxu0
        %930 = vmatprep.mubr.f32.mxu0 0.0
        %v931 = vand.u32 %v187, 4294901760
        %932 = vmatmul.mubr.f32.gmra.mrb[0].mxu0 %v931
        %v933 = vpop.f32.mrb[0].mxu0
        %v934 = vadd.f32 %v819, %v933
        %v935 = vpop.f32.mrb[0].mxu0
        %936 = vmatprep.mubr.f32.mxu0 0.0
        %v937 = vand.u32 %v190, 4294901760
        %938 = vmatmul.mubr.f32.gmra.mrb[0].mxu0 %v937
        %v939 = vpop.f32.mrb[0].mxu0
        %v940 = vadd.f32 %v825, %v939
        %v941 = vpop.f32.mrb[0].mxu0
        %942 = vmatprep.mubr.f32.mxu0 0.0
        %v943 = vand.u32 %v193, 4294901760
        %944 = vmatmul.mubr.f32.gmra.mrb[0].mxu0 %v943
        %v945 = vpop.f32.mrb[0].mxu0
        %v946 = vadd.f32 %v831, %v945
        %v947 = vpop.f32.mrb[0].mxu0
        %948 = vmatprep.mubr.f32.mxu0 0.0
        %v949 = vand.u32 %v196, 4294901760
        %950 = vmatmul.mubr.f32.gmra.mrb[0].mxu0 %v949
        %v951 = vpop.f32.mrb[0].mxu0
        %v952 = vadd.f32 %v837, %v951
        %v953 = vpop.f32.mrb[0].mxu0
        %954 = vmatprep.mubr.f32.mxu0 0.0
        %v955 = vand.u32 %v199, 4294901760
        %956 = vmatmul.mubr.f32.gmra.mrb[0].mxu0 %v955
        %v957 = vpop.f32.mrb[0].mxu0
        %v958 = vadd.f32 %v843, %v957
        %v959 = vpop.f32.mrb[0].mxu0
        %960 = vdwg.mxu0
        %vm961 = vcmask 261120
        %962 = vst.msk [vmem:[%s164] sm:$0xff] %vm961, %v916
        %963 = vst.msk [vmem:[%s164 + $0x8] sm:$0xff] %vm961, %v922
        %964 = vst.msk [vmem:[%s164 + $0x10] sm:$0xff] %vm961, %v928
        %965 = vst.msk [vmem:[%s164 + $0x18] sm:$0xff] %vm961, %v934
        %966 = vst.msk [vmem:[%s164 + $0x20] sm:$0xff] %vm961, %v940
        %967 = vst.msk [vmem:[%s164 + $0x28] sm:$0xff] %vm961, %v946
        %968 = vst.msk [vmem:[%s164 + $0x30] sm:$0xff] %vm961, %v952
        %969 = vst.msk [vmem:[%s164 + $0x38] sm:$0xff] %vm961, %v958
        %978 = vrot.lane.b32.xlu0 %v916, 32
        %v979 = vpop.permute.xlu0 %978
        %980 = vrot.lane.b32.xlu0 %v922, 32
        %v981 = vpop.permute.xlu0 %980
        %982 = vrot.lane.b32.xlu0 %v928, 32
        %v983 = vpop.permute.xlu0 %982
        %984 = vrot.lane.b32.xlu0 %v934, 32
        %v985 = vpop.permute.xlu0 %984
        %986 = vrot.lane.b32.xlu0 %v940, 32
        %v987 = vpop.permute.xlu0 %986
        %988 = vrot.lane.b32.xlu0 %v946, 32
        %v989 = vpop.permute.xlu0 %988
        %990 = vrot.lane.b32.xlu0 %v952, 32
        %v991 = vpop.permute.xlu0 %990
        %992 = vrot.lane.b32.xlu0 %v958, 32
        %v993 = vpop.permute.xlu0 %992
        %vm1002 = vcmask 523520
        %1003 = vst.msk [vmem:[%s164] sm:$0xff] %vm1002, %v979
        %1004 = vst.msk [vmem:[%s164 + $0x8] sm:$0xff] %vm1002, %v981
        %1005 = vst.msk [vmem:[%s164 + $0x10] sm:$0xff] %vm1002, %v983
        %1006 = vst.msk [vmem:[%s164 + $0x18] sm:$0xff] %vm1002, %v985
        %1007 = vst.msk [vmem:[%s164 + $0x20] sm:$0xff] %vm1002, %v987
        %1008 = vst.msk [vmem:[%s164 + $0x28] sm:$0xff] %vm1002, %v989
        %1009 = vst.msk [vmem:[%s164 + $0x30] sm:$0xff] %vm1002, %v991
        %1010 = vst.msk [vmem:[%s164 + $0x38] sm:$0xff] %vm1002, %v993
        %s1011 = smul.u32 8, %s16
        %p1012 = scmp.lt.s32.totalorder %s1011, 15
        %s1013 = scalar_select %p1012, %s1011, 15
        %s1014 = smul.addr %s1013, 8
        %s1015 = scalar_lea.vmem %s2, %s1014
        // Predicated region
        $region33: #{upsample.1} parent=27 // pred_check
          %p1016 = pneg %p81
        $region34: #{upsample.1} parent=27 // pred_check_branch
          %1018 = sbr.rel (%p1016) target = $region36
        $region35: #{upsample.1} parent=27 // pred_region
          %s1019 = smul.u32 8, %s16
        $region36: #{upsample.1} parent=27 // pred_fallthru
          _
      $region28: #{upsample.1} parent=5 // pred_fallthru
        _
      %p1020 = scmp.le.s32.totalorder 2, %s11
      // Predicated region
      $region37: #{upsample.1} parent=5 // pred_check
        %p1021 = pneg %p1020
      $region38: #{upsample.1} parent=5 // pred_check_branch
        %1023 = sbr.rel (%p1021) target = $region40
      $region39: #{upsample.1} parent=5 // pred_region
        %s1024 = ssub.s32 %s11, 2
        // Predicated region
        $region41: #{upsample.1} parent=39 // pred_check
          %p1025 = pneg %p87
        $region42: #{upsample.1} parent=39 // pred_check_branch
          %1027 = sbr.rel (%p1025) target = $region44
        $region43: #{upsample.1} parent=39 // pred_region
          %s1028 = smul.u32 8, %s17
          %p1029 = scmp.lt.s32.totalorder %s1028, 15
          %s1030 = scalar_select %p1029, %s1028, 15
          %s1031 = smul.addr %s1030, 8
          %s1032 = scalar_lea.vmem %s2, %s1031
        $region44: #{upsample.1} parent=39 // pred_fallthru
          _
      $region40: #{upsample.1} parent=5 // pred_fallthru
        _
    $region6: #{upsample.1} parent=1 // loop_footer
      %s15 = sadd.s32 1, %s11
    $region7: #{upsample.1} parent=1 // loop_footer_branch
      %10 = sbr.rel target = $region3
    $region8: #{upsample.1} parent=1 // loop_exit
      _
    %1033 = vsyncpa [#allocation3], 1
    %s1034 = scalar_lea.sflag [#allocation3], 1
    %1035 = vsyncpa %s1034, 1

</llo_original>
